<compile_context>
chip_gen: v6e
topology: v6e:2x2x1
jax: 0.10.0
libtpu: 0.0.40
codegen_flags: <defaults>
</compile_context>

<pallas_src>
import jax
import jax.numpy as jnp
from jax.experimental import pallas as pl
from jax.experimental.pallas import tpu as pltpu


def _attention_decoder_cell_kernel(
    enc_ref,      # (Bt, S, H)  encoder_output tile
    h_ref,        # (Bt, H)     prev_hidden tile (used as both h0 and c0)
    y_ref,        # (Bt, F)     y tile
    wa_h_ref,     # (H, S)      attention_linear weight, hidden part, transposed
    wa_y_ref,     # (F, S)      attention_linear weight, y part, transposed
    ba_ref,       # (1, S)      attention_linear bias
    wg_ref,       # (2H, 3H)    fused [W_ih ; W_hh]^T for gates i, f, g (o dropped)
    bg_ref,       # (1, 3H)     fused gate bias (b_ih + b_hh)
    wout_ref,     # (H, F)      out weight transposed
    bout_ref,     # (1, F)      out bias
    slab_ref,     # (Bt, H+F)   output slab: [:, :H] = rnn_hidden (c'), [:, H:] = out
):
    h = h_ref[...]
    y = y_ref[...]
    H = h.shape[-1]

    # --- attention_linear(cat(prev_hidden, y)): concat folded into split matmul ---
    logits = (
        jnp.dot(h, wa_h_ref[...], preferred_element_type=jnp.float32)
        + jnp.dot(y, wa_y_ref[...], preferred_element_type=jnp.float32)
        + ba_ref[...]
    )                                                     # (Bt, S)

    # --- softmax over the sequence dim (exact; one reciprocal per row) ---
    m = jnp.max(logits, axis=-1, keepdims=True)
    e = jnp.exp(logits - m)
    aw = e * (1.0 / jnp.sum(e, axis=-1, keepdims=True))   # (Bt, S)

    # --- attention context: bmm((Bt,1,S),(Bt,S,H)).squeeze(1) ---
    # M=1 batched matmuls waste the MXU (1/128..1/256 row fill, push/pop per
    # batch element), so use VPU multiply + sublane/XLU reduce.  Those slots
    # are otherwise idle here.  Keep the MXU path only for very large S.
    if enc_ref.shape[1] >= 512:
        ac = jnp.einsum(
            "bqs,bsh->bqh", aw[:, None, :], enc_ref[...],
            preferred_element_type=jnp.float32,
        )[:, 0, :]                                        # (Bt, H)
    else:
        ac = jnp.sum(aw[:, :, None] * enc_ref[...], axis=1)   # (Bt, H)

    # --- LSTMCell(attention_combine, (prev_hidden, prev_hidden)) ---
    # Single fused gate matmul: [x ; h] (Bt, 2H) @ (2H, 3H).  o-gate is never
    # used by the module (rnn_hidden is the cell state) so it was dropped.
    xh = jnp.concatenate([ac, h], axis=-1)                # (Bt, 2H)
    gates = (
        jnp.dot(xh, wg_ref[...], preferred_element_type=jnp.float32)
        + bg_ref[...]
    )                                                     # (Bt, 3H)
    i_g = jax.nn.sigmoid(gates[:, 0:H])
    f_g = jax.nn.sigmoid(gates[:, H:2 * H])
    g_g = jnp.tanh(gates[:, 2 * H:3 * H])
    c_new = f_g * h + i_g * g_g                           # (Bt, H) == rnn_hidden

    # --- output = self.out(rnn_hidden) ---
    out = (
        jnp.dot(c_new, wout_ref[...], preferred_element_type=jnp.float32)
        + bout_ref[...]
    )                                                     # (Bt, F)

    # One lane-contiguous store per tile (hid | out).
    slab_ref[...] = jnp.concatenate([c_new, out], axis=-1).astype(slab_ref.dtype)


def _round_up(x, m):
    return -(-x // m) * m


def _weight_bytes(S, H, F):
    # f32, single-buffered (constant index maps + Buffered(1)).
    return ((H + F + 1) * S + (2 * H + 1) * 3 * H + (H + 1) * F) * 4


def _tile_vmem_bytes(bt, S, H, F):
    # Double-buffered activation tiles + the (Bt,S,H) product temporary used by
    # the VPU attention reduce + single-buffered weights.
    act = bt * (S * H + H + F + (H + F)) * 4
    tmp = bt * S * H * 4
    return 2 * act + tmp + _weight_bytes(S, H, F)


def _vmem_budget_and_limit():
    """Generation-aware VMEM sizing (128 MiB v5e/v6e, 64 MiB/TC v7x)."""
    try:
        cap = int(getattr(pltpu.get_tpu_info(), "vmem_capacity_bytes", 64 << 20))
    except Exception:
        cap = 64 << 20  # conservative v7x-class fallback
    budget = (cap * 55) // 100    # target for tiles + resident weights
    limit_cap = (cap * 3) // 4    # hard ceiling for vmem_limit_bytes
    return budget, limit_cap


def _pick_batch_tile(B, S, H, F, budget_bytes):
    """Largest 8-aligned batch tile that fits the budget; >=2 grid steps for
    B >= 16 so both v7x TensorCores get work; ragged batches are padded."""
    if B <= 8:
        return B                      # block dim == full array dim is allowed
    max_bt = _round_up(B, 8)
    if B >= 16:
        max_bt = min(max_bt, _round_up(-(-B // 2), 8))
    bt = max_bt
    while bt > 8 and _tile_vmem_bytes(bt, S, H, F) > budget_bytes:
        bt -= 8
    return bt


def prepare_decoder_params(params, hidden_size, param_dtype=jnp.float32):
    """One-time weight prep (transposes / gate fusion), hoisted out of the
    per-decode-step call path.  `param_dtype=jnp.bfloat16` halves weight
    traffic if 1e-5 parity is not required (keep biases in f32)."""
    H = hidden_size
    wa = jnp.asarray(params["attn_w"])            # (S, H + F)  PyTorch (out, in)
    S = wa.shape[0]
    F = wa.shape[1] - H
    w_ih = jnp.asarray(params["w_ih"])            # (4H, H) gate order i, f, g, o
    w_hh = jnp.asarray(params["w_hh"])
    # Drop the unused o-gate; fuse i/f/g of W_ih and W_hh into one (2H, 3H) slab.
    wg = jnp.concatenate([w_ih[:3 * H].T, w_hh[:3 * H].T], axis=0)
    bg = (jnp.asarray(params["b_ih"][:3 * H])
          + jnp.asarray(params["b_hh"][:3 * H])).reshape(1, 3 * H)
    cast = lambda x: x.astype(param_dtype)
    return {
        "wa_h": cast(wa[:, :H].T),                                   # (H, S)
        "wa_y": cast(wa[:, H:].T),                                   # (F, S)
        "ba":   jnp.asarray(params["attn_b"]).reshape(1, S).astype(jnp.float32),
        "wg":   cast(wg),                                            # (2H, 3H)
        "bg":   bg.astype(jnp.float32),                              # (1, 3H)
        "wout": cast(jnp.asarray(params["out_w"]).T),                # (H, F)
        "bout": jnp.asarray(params["out_b"]).reshape(1, F).astype(jnp.float32),
    }


def attention_decoder_cell(encoder_output, prev_hidden, y, prepped):
    """Pallas implementation of AttentionDecoderCell.forward.

    encoder_output: (B, S, H); prev_hidden: (B, H) or (L, B, H); y: (B, F).
    `prepped` comes from prepare_decoder_params().
    Returns (output (B, F), rnn_hidden (B, H))  [rnn_hidden == new cell state c'].
    """
    if prev_hidden.ndim == 3:
        prev_hidden = prev_hidden[-1]

    B, S, H = encoder_output.shape
    F = y.shape[1]

    budget, limit_cap = _vmem_budget_and_limit()
    Bt = _pick_batch_tile(B, S, H, F, budget)

    num_tiles = -(-B // Bt)
    B_pad = num_tiles * Bt
    if B_pad != B:
        pad = B_pad - B
        encoder_output = jnp.pad(encoder_output, ((0, pad), (0, 0), (0, 0)))
        prev_hidden = jnp.pad(prev_hidden, ((0, pad), (0, 0)))
        y = jnp.pad(y, ((0, pad), (0, 0)))
    grid = (num_tiles,)

    act_specs = [
        pl.BlockSpec((Bt, S, H), lambda b: (b, 0, 0)),   # encoder_output tile
        pl.BlockSpec((Bt, H), lambda b: (b, 0)),         # prev_hidden tile
        pl.BlockSpec((Bt, F), lambda b: (b, 0)),         # y tile
    ]

    def _weight_spec(shape):
        nd = len(shape)
        # Constant block index -> never re-DMA'd; single-buffer to save VMEM.
        return pl.BlockSpec(shape, lambda b, _nd=nd: (0,) * _nd,
                            pipeline_mode=pl.Buffered(1))

    w_names = ("wa_h", "wa_y", "ba", "wg", "bg", "wout", "bout")
    w_args = [prepped[n] for n in w_names]
    w_specs = [_weight_spec(w.shape) for w in w_args]

    need = _tile_vmem_bytes(Bt, S, H, F)
    vmem_limit = int(min(limit_cap, max(16 << 20, need + (8 << 20))))

    slab = pl.pallas_call(
        _attention_decoder_cell_kernel,
        out_shape=jax.ShapeDtypeStruct((B_pad, H + F), jnp.float32),
        grid=grid,
        in_specs=act_specs + w_specs,
        out_specs=pl.BlockSpec((Bt, H + F), lambda b: (b, 0)),
        compiler_params=pltpu.CompilerParams(
            dimension_semantics=("parallel",),
            vmem_limit_bytes=vmem_limit,
        ),
    )(encoder_output, prev_hidden, y, *w_args)

    rnn_hidden = slab[:B, :H]
    output = slab[:B, H:]
    return output, rnn_hidden


def _reference(encoder_output, prev_hidden, y, params):
    """Pure-JAX reference mirroring the PyTorch forward for validation."""
    if prev_hidden.ndim == 3:
        prev_hidden = prev_hidden[-1]
    attn_in = jnp.concatenate([prev_hidden, y], axis=1)
    logits = attn_in @ params["attn_w"].T + params["attn_b"]
    aw = jax.nn.softmax(logits, axis=-1)[:, None, :]                # (B,1,S)
    ac = jnp.einsum("bis,bsh->bih", aw, encoder_output)[:, 0, :]    # (B,H)
    gates = (ac @ params["w_ih"].T + params["b_ih"]
             + prev_hidden @ params["w_hh"].T + params["b_hh"])
    H = prev_hidden.shape[-1]
    i_g = jax.nn.sigmoid(gates[:, 0:H])
    f_g = jax.nn.sigmoid(gates[:, H:2 * H])
    g_g = jnp.tanh(gates[:, 2 * H:3 * H])
    c = f_g * prev_hidden + i_g * g_g
    out = c @ params["out_w"].T + params["out_b"]
    return out, c


if __name__ == "__main__":
    # Small shapes consistent with the module's forward.
    B, S, H, F = 2, 8, 32, 4   # batch, sequence_len, hidden_size, input_feature_len

    key = jax.random.PRNGKey(0)
    ks = jax.random.split(key, 12)

    encoder_output = jax.random.normal(ks[0], (B, S, H), dtype=jnp.float32)
    prev_hidden = jax.random.normal(ks[1], (B, H), dtype=jnp.float32)
    y = jax.random.normal(ks[2], (B, F), dtype=jnp.float32)

    # Deterministic synthetic parameters (shapes from nn.Linear / nn.LSTMCell).
    scale = 0.1
    params = {
        "attn_w": scale * jax.random.normal(ks[3], (S, H + F), dtype=jnp.float32),
        "attn_b": scale * jax.random.normal(ks[4], (S,), dtype=jnp.float32),
        "w_ih":   scale * jax.random.normal(ks[5], (4 * H, H), dtype=jnp.float32),
        "b_ih":   scale * jax.random.normal(ks[6], (4 * H,), dtype=jnp.float32),
        "w_hh":   scale * jax.random.normal(ks[7], (4 * H, H), dtype=jnp.float32),
        "b_hh":   scale * jax.random.normal(ks[8], (4 * H,), dtype=jnp.float32),
        "out_w":  scale * jax.random.normal(ks[9], (F, H), dtype=jnp.float32),
        "out_b":  scale * jax.random.normal(ks[10], (F,), dtype=jnp.float32),
    }

    # One-time weight prep (per-step calls do no transposes).
    prepped = jax.tree_util.tree_map(jax.block_until_ready,
                                     prepare_decoder_params(params, hidden_size=H))

    cell = jax.jit(attention_decoder_cell)
    out, hid = cell(encoder_output, prev_hidden, y, prepped)
    out, hid = jax.block_until_ready(out), jax.block_until_ready(hid)

    ref_out, ref_hid = _reference(encoder_output, prev_hidden, y, params)
    assert jnp.allclose(out, ref_out, atol=1e-5, rtol=1e-5)
    assert jnp.allclose(hid, ref_hid, atol=1e-5, rtol=1e-5)

    print("KERNEL_OK")
</pallas_src>

<mosaic_0001>
module attributes {stable_mosaic.version = 11 : i64} {
  func.func @_attention_decoder_cell_kernel(%arg0: i32, %arg1: memref<2x8x32xf32, #tpu.memory_space<vmem>>, %arg2: memref<2x32xf32, #tpu.memory_space<vmem>>, %arg3: memref<2x4xf32, #tpu.memory_space<vmem>>, %arg4: memref<32x8xf32, #tpu.memory_space<vmem>>, %arg5: memref<4x8xf32, #tpu.memory_space<vmem>>, %arg6: memref<1x8xf32, #tpu.memory_space<vmem>>, %arg7: memref<64x96xf32, #tpu.memory_space<vmem>>, %arg8: memref<1x96xf32, #tpu.memory_space<vmem>>, %arg9: memref<32x4xf32, #tpu.memory_space<vmem>>, %arg10: memref<1x4xf32, #tpu.memory_space<vmem>>, %arg11: memref<2x36xf32, #tpu.memory_space<vmem>>) attributes {dimension_semantics = [#tpu.dimension_semantics<parallel>], iteration_bounds = array<i64: 1>, scalar_prefetch = 0 : i64, scratch_operands = 0 : i64, tpu.core_type = #tpu.core_type<tc>, window_params = [{transform_indices = @transform_0, window_bounds = array<i64: 2, 8, 32>}, {transform_indices = @transform_1, window_bounds = array<i64: 2, 32>}, {transform_indices = @transform_2, window_bounds = array<i64: 2, 4>}, {pipeline_mode = #tpu.pipeline_mode<synchronous>, transform_indices = @transform_3, window_bounds = array<i64: 32, 8>}, {pipeline_mode = #tpu.pipeline_mode<synchronous>, transform_indices = @transform_4, window_bounds = array<i64: 4, 8>}, {pipeline_mode = #tpu.pipeline_mode<synchronous>, transform_indices = @transform_5, window_bounds = array<i64: 1, 8>}, {pipeline_mode = #tpu.pipeline_mode<synchronous>, transform_indices = @transform_6, window_bounds = array<i64: 64, 96>}, {pipeline_mode = #tpu.pipeline_mode<synchronous>, transform_indices = @transform_7, window_bounds = array<i64: 1, 96>}, {pipeline_mode = #tpu.pipeline_mode<synchronous>, transform_indices = @transform_8, window_bounds = array<i64: 32, 4>}, {pipeline_mode = #tpu.pipeline_mode<synchronous>, transform_indices = @transform_9, window_bounds = array<i64: 1, 4>}, {transform_indices = @transform_10, window_bounds = array<i64: 2, 36>}]} {
    %c0 = arith.constant 0 : index
    %c0_0 = arith.constant 0 : index
    %0 = vector.load %arg2[%c0, %c0_0] : memref<2x32xf32, #tpu.memory_space<vmem>>, vector<2x32xf32>
    %c0_1 = arith.constant 0 : index
    %c0_2 = arith.constant 0 : index
    %1 = vector.load %arg3[%c0_1, %c0_2] : memref<2x4xf32, #tpu.memory_space<vmem>>, vector<2x4xf32>
    %c0_3 = arith.constant 0 : index
    %c0_4 = arith.constant 0 : index
    %2 = vector.load %arg4[%c0_3, %c0_4] : memref<32x8xf32, #tpu.memory_space<vmem>>, vector<32x8xf32>
    %cst = arith.constant dense<0.000000e+00> : vector<2x8xf32>
    %3 = tpu.matmul %0, %2, %cst {dimension_numbers = #tpu.dot_dimension_numbers<[1], [0], [0], [1], [0, 0, 1, 1], [], []>} : vector<2x32xf32>, vector<32x8xf32>, vector<2x8xf32> -> vector<2x8xf32>
    %c0_5 = arith.constant 0 : index
    %c0_6 = arith.constant 0 : index
    %4 = vector.load %arg5[%c0_5, %c0_6] : memref<4x8xf32, #tpu.memory_space<vmem>>, vector<4x8xf32>
    %cst_7 = arith.constant dense<0.000000e+00> : vector<2x8xf32>
    %5 = tpu.matmul %1, %4, %cst_7 {dimension_numbers = #tpu.dot_dimension_numbers<[1], [0], [0], [1], [0, 0, 1, 1], [], []>} : vector<2x4xf32>, vector<4x8xf32>, vector<2x8xf32> -> vector<2x8xf32>
    %6 = arith.addf %3, %5 : vector<2x8xf32>
    %c0_8 = arith.constant 0 : index
    %c0_9 = arith.constant 0 : index
    %7 = vector.load %arg6[%c0_8, %c0_9] : memref<1x8xf32, #tpu.memory_space<vmem>>, vector<1x8xf32>
    %8 = vector.broadcast %7 : vector<1x8xf32> to vector<2x8xf32>
    %9 = arith.addf %6, %8 : vector<2x8xf32>
    %cst_10 = arith.constant dense<0xFF800000> : vector<2xf32>
    %10 = vector.multi_reduction <maximumf>, %9, %cst_10 [1] : vector<2x8xf32> to vector<2xf32>
    %11 = vector.shape_cast %10 : vector<2xf32> to vector<2x1xf32>
    %12 = vector.broadcast %11 : vector<2x1xf32> to vector<2x8xf32>
    %13 = arith.subf %9, %12 : vector<2x8xf32>
    %14 = math.exp %13 : vector<2x8xf32>
    %cst_11 = arith.constant dense<0.000000e+00> : vector<2xf32>
    %15 = vector.multi_reduction <add>, %14, %cst_11 [1] : vector<2x8xf32> to vector<2xf32>
    %16 = vector.shape_cast %15 : vector<2xf32> to vector<2x1xf32>
    %cst_12 = arith.constant 1.000000e+00 : f32
    %17 = vector.broadcast %cst_12 : f32 to vector<2x1xf32>
    %18 = arith.divf %17, %16 : vector<2x1xf32>
    %19 = vector.broadcast %18 : vector<2x1xf32> to vector<2x8xf32>
    %20 = arith.mulf %14, %19 : vector<2x8xf32>
    %21 = vector.shape_cast %20 : vector<2x8xf32> to vector<2x8x1xf32>
    %c0_13 = arith.constant 0 : index
    %c0_14 = arith.constant 0 : index
    %c0_15 = arith.constant 0 : index
    %22 = vector.load %arg1[%c0_13, %c0_14, %c0_15] : memref<2x8x32xf32, #tpu.memory_space<vmem>>, vector<2x8x32xf32>
    %23 = vector.broadcast %21 : vector<2x8x1xf32> to vector<2x8x32xf32>
    %24 = arith.mulf %23, %22 : vector<2x8x32xf32>
    %cst_16 = arith.constant dense<0.000000e+00> : vector<2x32xf32>
    %25 = vector.multi_reduction <add>, %24, %cst_16 [1] : vector<2x8x32xf32> to vector<2x32xf32>
    %26 = tpu.concatenate %25, %0 in 1 : vector<2x32xf32>, vector<2x32xf32> -> vector<2x64xf32>
    %c0_17 = arith.constant 0 : index
    %c0_18 = arith.constant 0 : index
    %27 = vector.load %arg7[%c0_17, %c0_18] : memref<64x96xf32, #tpu.memory_space<vmem>>, vector<64x96xf32>
    %cst_19 = arith.constant dense<0.000000e+00> : vector<2x96xf32>
    %28 = tpu.matmul %26, %27, %cst_19 {dimension_numbers = #tpu.dot_dimension_numbers<[1], [0], [0], [1], [0, 0, 1, 1], [], []>} : vector<2x64xf32>, vector<64x96xf32>, vector<2x96xf32> -> vector<2x96xf32>
    %c0_20 = arith.constant 0 : index
    %c0_21 = arith.constant 0 : index
    %29 = vector.load %arg8[%c0_20, %c0_21] : memref<1x96xf32, #tpu.memory_space<vmem>>, vector<1x96xf32>
    %30 = vector.broadcast %29 : vector<1x96xf32> to vector<2x96xf32>
    %31 = arith.addf %28, %30 : vector<2x96xf32>
    %32 = vector.extract_strided_slice %31 {offsets = [0, 0], sizes = [2, 32], strides = [1, 1]} : vector<2x96xf32> to vector<2x32xf32>
    %33 = arith.negf %32 : vector<2x32xf32>
    %34 = math.exp %33 : vector<2x32xf32>
    %cst_22 = arith.constant 1.000000e+00 : f32
    %35 = vector.broadcast %cst_22 : f32 to vector<2x32xf32>
    %36 = arith.addf %35, %34 : vector<2x32xf32>
    %37 = arith.divf %35, %36 : vector<2x32xf32>
    %38 = vector.extract_strided_slice %31 {offsets = [0, 32], sizes = [2, 32], strides = [1, 1]} : vector<2x96xf32> to vector<2x32xf32>
    %39 = arith.negf %38 : vector<2x32xf32>
    %40 = math.exp %39 : vector<2x32xf32>
    %cst_23 = arith.constant 1.000000e+00 : f32
    %41 = vector.broadcast %cst_23 : f32 to vector<2x32xf32>
    %42 = arith.addf %41, %40 : vector<2x32xf32>
    %43 = arith.divf %41, %42 : vector<2x32xf32>
    %44 = vector.extract_strided_slice %31 {offsets = [0, 64], sizes = [2, 32], strides = [1, 1]} : vector<2x96xf32> to vector<2x32xf32>
    %45 = math.tanh %44 : vector<2x32xf32>
    %46 = arith.mulf %43, %0 : vector<2x32xf32>
    %47 = arith.mulf %37, %45 : vector<2x32xf32>
    %48 = arith.addf %46, %47 : vector<2x32xf32>
    %c0_24 = arith.constant 0 : index
    %c0_25 = arith.constant 0 : index
    %49 = vector.load %arg9[%c0_24, %c0_25] : memref<32x4xf32, #tpu.memory_space<vmem>>, vector<32x4xf32>
    %cst_26 = arith.constant dense<0.000000e+00> : vector<2x4xf32>
    %50 = tpu.matmul %48, %49, %cst_26 {dimension_numbers = #tpu.dot_dimension_numbers<[1], [0], [0], [1], [0, 0, 1, 1], [], []>} : vector<2x32xf32>, vector<32x4xf32>, vector<2x4xf32> -> vector<2x4xf32>
    %c0_27 = arith.constant 0 : index
    %c0_28 = arith.constant 0 : index
    %51 = vector.load %arg10[%c0_27, %c0_28] : memref<1x4xf32, #tpu.memory_space<vmem>>, vector<1x4xf32>
    %52 = vector.broadcast %51 : vector<1x4xf32> to vector<2x4xf32>
    %53 = arith.addf %50, %52 : vector<2x4xf32>
    %54 = tpu.concatenate %48, %53 in 1 : vector<2x32xf32>, vector<2x4xf32> -> vector<2x36xf32>
    %c0_29 = arith.constant 0 : index
    %c0_30 = arith.constant 0 : index
    %55 = vector.load %arg11[%c0_29, %c0_30] : memref<2x36xf32, #tpu.memory_space<vmem>>, vector<2x36xf32>
    tpu.vector_store %arg11[%c0_29, %c0_30], %54 {strides = array<i32>} : memref<2x36xf32, #tpu.memory_space<vmem>>, vector<2x36xf32>,
    return
  }
  func.func @transform_0(%arg0: i32) -> (i32, i32, i32) {
    %c0_i32 = arith.constant 0 : i32
    %c0_i32_0 = arith.constant 0 : i32
    %c0_i32_1 = arith.constant 0 : i32
    return %arg0, %c0_i32, %c0_i32_0 : i32, i32, i32
  }
  func.func @transform_1(%arg0: i32) -> (i32, i32) {
    %c0_i32 = arith.constant 0 : i32
    %c0_i32_0 = arith.constant 0 : i32
    return %arg0, %c0_i32 : i32, i32
  }
  func.func @transform_2(%arg0: i32) -> (i32, i32) {
    %c0_i32 = arith.constant 0 : i32
    %c0_i32_0 = arith.constant 0 : i32
    return %arg0, %c0_i32 : i32, i32
  }
  func.func @transform_3(%arg0: i32) -> (i32, i32) {
    %c0_i32 = arith.constant 0 : i32
    %c0_i32_0 = arith.constant 0 : i32
    %c0_i32_1 = arith.constant 0 : i32
    return %c0_i32, %c0_i32_0 : i32, i32
  }
  func.func @transform_4(%arg0: i32) -> (i32, i32) {
    %c0_i32 = arith.constant 0 : i32
    %c0_i32_0 = arith.constant 0 : i32
    %c0_i32_1 = arith.constant 0 : i32
    return %c0_i32, %c0_i32_0 : i32, i32
  }
  func.func @transform_5(%arg0: i32) -> (i32, i32) {
    %c0_i32 = arith.constant 0 : i32
    %c0_i32_0 = arith.constant 0 : i32
    %c0_i32_1 = arith.constant 0 : i32
    return %c0_i32, %c0_i32_0 : i32, i32
  }
  func.func @transform_6(%arg0: i32) -> (i32, i32) {
    %c0_i32 = arith.constant 0 : i32
    %c0_i32_0 = arith.constant 0 : i32
    %c0_i32_1 = arith.constant 0 : i32
    return %c0_i32, %c0_i32_0 : i32, i32
  }
  func.func @transform_7(%arg0: i32) -> (i32, i32) {
    %c0_i32 = arith.constant 0 : i32
    %c0_i32_0 = arith.constant 0 : i32
    %c0_i32_1 = arith.constant 0 : i32
    return %c0_i32, %c0_i32_0 : i32, i32
  }
  func.func @transform_8(%arg0: i32) -> (i32, i32) {
    %c0_i32 = arith.constant 0 : i32
    %c0_i32_0 = arith.constant 0 : i32
    %c0_i32_1 = arith.constant 0 : i32
    return %c0_i32, %c0_i32_0 : i32, i32
  }
  func.func @transform_9(%arg0: i32) -> (i32, i32) {
    %c0_i32 = arith.constant 0 : i32
    %c0_i32_0 = arith.constant 0 : i32
    %c0_i32_1 = arith.constant 0 : i32
    return %c0_i32, %c0_i32_0 : i32, i32
  }
  func.func @transform_10(%arg0: i32) -> (i32, i32) {
    %c0_i32 = arith.constant 0 : i32
    %c0_i32_0 = arith.constant 0 : i32
    return %arg0, %c0_i32 : i32, i32
  }
}

</mosaic_0001>

<llo_original>
// kernel: attention_decoder_cell.1
$region0: #{attention_decoder_cell.1}
  #allocation0 [shape = 'u32[]', space=smem, size = 0x4, offset = 0x4, fixed_abs, tag = 'smem constant byte address 0x4 - core index']
  #allocation1 [shape = 'u32[144,128]{1,0:T(1,128)}', space=vmem, size = 0x12000, scoped, tag = 'internal scratch']
  %s0 = inlined_call_operand.vmem [shape: f32[2,8,32], index: 0, kind: input, shape index: {}]
  %s1 = inlined_call_operand.vmem [shape: f32[2,32], index: 1, kind: input, shape index: {}]
  %s2 = inlined_call_operand.vmem [shape: f32[2,4], index: 2, kind: input, shape index: {}]
  %s3 = inlined_call_operand.vmem [shape: f32[32,8], index: 3, kind: input, shape index: {}]
  %s4 = inlined_call_operand.vmem [shape: f32[4,8], index: 4, kind: input, shape index: {}]
  %s5 = inlined_call_operand.hbm [shape: f32[1,8], index: 5, kind: input, shape index: {}]
  %s6 = inlined_call_operand.vmem [shape: f32[64,96], index: 6, kind: input, shape index: {}]
  %s7 = inlined_call_operand.hbm [shape: f32[1,96], index: 7, kind: input, shape index: {}]
  %s8 = inlined_call_operand.vmem [shape: f32[32,4], index: 8, kind: input, shape index: {}]
  %s9 = inlined_call_operand.hbm [shape: f32[1,4], index: 9, kind: input, shape index: {}]
  %s10 = inlined_call_operand.vmem [shape: f32[2,36], index: 10, kind: output, shape index: {}]
  %s11 = sld [smem:[#allocation0]]
  $region62: #{attention_decoder_cell.1} parent=0
    _
  %s13 = ssub.s32 1, %s11
  %s14 = scalar_select 0, %s13, %s11
  $region1: #{attention_decoder_cell.1} parent=0
    #allocation2 [shape = 'u8[512]{0}', space=vmem, size = 0x400, scoped, tag = 'input window, operand 5, single buffered']
    #allocation3 [shape = 's32[1]{0}', space=sflag, size = 0x4, scoped, tag = 'scoped memory for attention_decoder_cell.1']
    #allocation4 [shape = 'u8[512]{0}', space=vmem, size = 0x400, scoped, tag = 'input window, operand 7, single buffered']
    #allocation5 [shape = 's32[1]{0}', space=sflag, size = 0x4, scoped, tag = 'scoped memory for attention_decoder_cell.1']
    #allocation6 [shape = 'u8[512]{0}', space=vmem, size = 0x400, scoped, tag = 'input window, operand 9, single buffered']
    %15 = vsyncpa [#allocation3], 0
    %16 = vsyncpa [#allocation5], 0
    // Predicated region
    $region2: #{attention_decoder_cell.1} parent=1 // pred_check
      _
    $region3: #{attention_decoder_cell.1} parent=1 // pred_check_branch
      %18 = sbr.rel (0) target = $region5
    $region4: #{attention_decoder_cell.1} parent=1 // pred_region
      _
    $region5: #{attention_decoder_cell.1} parent=1 // pred_fallthru
      _
    // Predicated region
    $region6: #{attention_decoder_cell.1} parent=1 // pred_check
      _
    $region7: #{attention_decoder_cell.1} parent=1 // pred_check_branch
      %20 = sbr.rel (0) target = $region9
    $region8: #{attention_decoder_cell.1} parent=1 // pred_region
      _
    $region9: #{attention_decoder_cell.1} parent=1 // pred_fallthru
      _
    // Predicated region
    $region10: #{attention_decoder_cell.1} parent=1 // pred_check
      _
    $region11: #{attention_decoder_cell.1} parent=1 // pred_check_branch
      %22 = sbr.rel (0) target = $region13
    $region12: #{attention_decoder_cell.1} parent=1 // pred_region
      _
    $region13: #{attention_decoder_cell.1} parent=1 // pred_fallthru
      _
    // Predicated region
    $region14: #{attention_decoder_cell.1} parent=1 // pred_check
      _
    $region15: #{attention_decoder_cell.1} parent=1 // pred_check_branch
      %24 = sbr.rel (0) target = $region17
    $region16: #{attention_decoder_cell.1} parent=1 // pred_region
      _
    $region17: #{attention_decoder_cell.1} parent=1 // pred_fallthru
      _
    // Predicated region
    $region18: #{attention_decoder_cell.1} parent=1 // pred_check
      _
    $region19: #{attention_decoder_cell.1} parent=1 // pred_check_branch
      %26 = sbr.rel (0) target = $region21
    $region20: #{attention_decoder_cell.1} parent=1 // pred_region
      _
    $region21: #{attention_decoder_cell.1} parent=1 // pred_fallthru
      _
    // Predicated region
    $region22: #{attention_decoder_cell.1} parent=1 // pred_check
      _
    $region23: #{attention_decoder_cell.1} parent=1 // pred_check_branch
      %28 = sbr.rel (0) target = $region25
    $region24: #{attention_decoder_cell.1} parent=1 // pred_region
      %s30 = ssub.s32 16, 16
      %31 = vsyncadd [#allocation3], %s30
      %s33 = sshll.u32 [#allocation2], 4
      %s34 = int_to_ptr.vmem [resolvable:$true] %s33
      %36 = dma.hbm_to_vmem [thread:$0]  %s5, 16, %s34, [#allocation3]
    $region25: #{attention_decoder_cell.1} parent=1 // pred_fallthru
      _
    // Predicated region
    $region26: #{attention_decoder_cell.1} parent=1 // pred_check
      _
    $region27: #{attention_decoder_cell.1} parent=1 // pred_check_branch
      %38 = sbr.rel (0) target = $region29
    $region28: #{attention_decoder_cell.1} parent=1 // pred_region
      _
    $region29: #{attention_decoder_cell.1} parent=1 // pred_fallthru
      _
    // Predicated region
    $region30: #{attention_decoder_cell.1} parent=1 // pred_check
      _
    $region31: #{attention_decoder_cell.1} parent=1 // pred_check_branch
      %40 = sbr.rel (0) target = $region33
    $region32: #{attention_decoder_cell.1} parent=1 // pred_region
      %s42 = ssub.s32 16, 16
      %43 = vsyncadd [#allocation5], %s42
      %s45 = sshll.u32 [#allocation4], 4
      %s46 = int_to_ptr.vmem [resolvable:$true] %s45
      %48 = dma.hbm_to_vmem [thread:$0]  %s7, 16, %s46, [#allocation5]
    $region33: #{attention_decoder_cell.1} parent=1 // pred_fallthru
      _
    // Predicated region
    $region34: #{attention_decoder_cell.1} parent=1 // pred_check
      _
    $region35: #{attention_decoder_cell.1} parent=1 // pred_check_branch
      %50 = sbr.rel (0) target = $region37
    $region36: #{attention_decoder_cell.1} parent=1 // pred_region
      _
    $region37: #{attention_decoder_cell.1} parent=1 // pred_fallthru
      _
    // Predicated region
    $region38: #{attention_decoder_cell.1} parent=1 // pred_check
      _
    $region39: #{attention_decoder_cell.1} parent=1 // pred_check_branch
      %52 = sbr.rel (0) target = $region41
    $region40: #{attention_decoder_cell.1} parent=1 // pred_region
      %s54 = ssub.s32 16, 16
      %55 = vsyncadd [#allocation5], %s54
      %s57 = sshll.u32 [#allocation6], 4
      %s58 = int_to_ptr.vmem [resolvable:$true] %s57
      %60 = dma.hbm_to_vmem [thread:$0]  %s9, 16, %s58, [#allocation5]
    $region41: #{attention_decoder_cell.1} parent=1 // pred_fallthru
      _
    // Predicated region
    $region42: #{attention_decoder_cell.1} parent=1 // pred_check
      _
    $region43: #{attention_decoder_cell.1} parent=1 // pred_check_branch
      %62 = sbr.rel (0) target = $region45
    $region44: #{attention_decoder_cell.1} parent=1 // pred_region
      %63 = dma.done [#allocation3], 16
    $region45: #{attention_decoder_cell.1} parent=1 // pred_fallthru
      _
    // Predicated region
    $region46: #{attention_decoder_cell.1} parent=1 // pred_check
      _
    $region47: #{attention_decoder_cell.1} parent=1 // pred_check_branch
      %65 = sbr.rel (0) target = $region49
    $region48: #{attention_decoder_cell.1} parent=1 // pred_region
      %66 = dma.done [#allocation5], 16
    $region49: #{attention_decoder_cell.1} parent=1 // pred_fallthru
      _
    // Predicated region
    $region50: #{attention_decoder_cell.1} parent=1 // pred_check
      _
    $region51: #{attention_decoder_cell.1} parent=1 // pred_check_branch
      %68 = sbr.rel (0) target = $region53
    $region52: #{attention_decoder_cell.1} parent=1 // pred_region
      %69 = dma.done [#allocation5], 16
    $region53: #{attention_decoder_cell.1} parent=1 // pred_fallthru
      _
    %v70 = vld [vmem:[%s1] sm:$0x3]
    %v71 = vld [vmem:[%s2] sm:$0x3]
    %v72 = vld [vmem:[%s3] sm:$0xff]
    %v73 = vld [vmem:[%s3 + $0x8] sm:$0xff]
    %v74 = vld [vmem:[%s3 + $0x10] sm:$0xff]
    %v75 = vld [vmem:[%s3 + $0x18] sm:$0xff]
    %v76 = vld [vmem:[%s4] sm:$0xf]
    %vm77 = vcmask 31744
    %v79 = vsel %vm77, %v71, 0
    %vm81 = vcmask 1043456
    %v83 = vsel %vm81, %v76, 0
    %85 = vmatprep.subr.mxu0 0.0
    %86 = vmatpush1.msra.mxu0 0.0
    %87 = vmatprep.subr.mxu0 0.0
    %88 = vmatpush1.msra.mxu0 0.0
    %89 = vmatprep.subr.mxu0 0.0
    %90 = vmatpush1.msra.mxu0 0.0
    %91 = vmatprep.subr.mxu0 0.0
    %92 = vmatpush1.msra.mxu0 0.0
    %93 = vmatprep.subr.mxu0 0.0
    %94 = vmatpush1.msra.mxu0 0.0
    %95 = vmatprep.subr.mxu0 0.0
    %96 = vmatpush1.msra.mxu0 0.0
    %97 = vmatprep.subr.mxu0 0.0
    %98 = vmatpush1.msra.mxu0 0.0
    %99 = vmatprep.subr.mxu0 0.0
    %100 = vmatpush1.msra.mxu0 0.0
    %101 = vmatprep.subr.mxu0 0.0
    %102 = vmatpush1.msra.mxu0 0.0
    %103 = vmatprep.subr.mxu0 0.0
    %104 = vmatpush1.msra.mxu0 0.0
    %105 = vmatprep.subr.mxu0 0.0
    %106 = vmatpush1.msra.mxu0 0.0
    %107 = vmatprep.subr.mxu0 0.0
    %108 = vmatpush1.msra.mxu0 0.0
    %109 = vmatprep.subr.mxu0 0.0
    %110 = vmatpush1.msra.mxu0 0.0
    %111 = vmatprep.subr.mxu0 0.0
    %112 = vmatpush1.msra.mxu0 0.0
    %113 = vmatprep.subr.mxu0 0.0
    %114 = vmatpush1.msra.mxu0 0.0
    %115 = vmatprep.subr.mxu0 0.0
    %116 = vmatpush1.msra.mxu0 %v83
    %117 = vmatprep.subr.mxu0 0.0
    %118 = vmatpush2.msra.mxu0 0.0
    %119 = vmatprep.subr.mxu0 0.0
    %120 = vmatpush2.msra.mxu0 0.0
    %121 = vmatprep.subr.mxu0 0.0
    %122 = vmatpush2.msra.mxu0 0.0
    %123 = vmatprep.subr.mxu0 0.0
    %124 = vmatpush2.msra.mxu0 0.0
    %125 = vmatprep.subr.mxu0 0.0
    %126 = vmatpush2.msra.mxu0 0.0
    %127 = vmatprep.subr.mxu0 0.0
    %128 = vmatpush2.msra.mxu0 0.0
    %129 = vmatprep.subr.mxu0 0.0
    %130 = vmatpush2.msra.mxu0 0.0
    %131 = vmatprep.subr.mxu0 0.0
    %132 = vmatpush2.msra.mxu0 0.0
    %133 = vmatprep.subr.mxu0 0.0
    %134 = vmatpush2.msra.mxu0 0.0
    %135 = vmatprep.subr.mxu0 0.0
    %136 = vmatpush2.msra.mxu0 0.0
    %137 = vmatprep.subr.mxu0 0.0
    %138 = vmatpush2.msra.mxu0 0.0
    %139 = vmatprep.subr.mxu0 0.0
    %140 = vmatpush2.msra.mxu0 0.0
    %141 = vmatprep.subr.mxu0 0.0
    %142 = vmatpush2.msra.mxu0 0.0
    %143 = vmatprep.subr.mxu0 0.0
    %144 = vmatpush2.msra.mxu0 0.0
    %145 = vmatprep.subr.mxu0 0.0
    %146 = vmatpush2.msra.mxu0 0.0
    %147 = vmatprep.subr.mxu0 0.0
    %148 = vmatpush2.msra.mxu0 0.0
    %149 = vmatprep.mubr.f32.mxu0 0.0
    %150 = vmatmul.mubr.f32.gmra.mxu0 %v79
    %v151 = vpop.f32.mrf.mxu0
    %v152 = vadd.f32 0.0, %v151
    %v153 = vpop.f32.mrf.mxu0
    %154 = vdwg.mxu0
    %vm155 = vcmask 261120
    %v157 = vsel %vm155, %v70, 0
    %159 = vmatprep.subr.mxu0 0.0
    %160 = vmatpush1.msra.mxu0 0.0
    %161 = vmatprep.subr.mxu0 0.0
    %162 = vmatpush1.msra.mxu0 0.0
    %163 = vmatprep.subr.mxu0 0.0
    %164 = vmatpush1.msra.mxu0 0.0
    %165 = vmatprep.subr.mxu0 0.0
    %166 = vmatpush1.msra.mxu0 0.0
    %167 = vmatprep.subr.mxu0 0.0
    %168 = vmatpush1.msra.mxu0 0.0
    %169 = vmatprep.subr.mxu0 0.0
    %170 = vmatpush1.msra.mxu0 0.0
    %171 = vmatprep.subr.mxu0 0.0
    %172 = vmatpush1.msra.mxu0 0.0
    %173 = vmatprep.subr.mxu0 0.0
    %174 = vmatpush1.msra.mxu0 0.0
    %175 = vmatprep.subr.mxu0 0.0
    %176 = vmatpush1.msra.mxu0 0.0
    %177 = vmatprep.subr.mxu0 0.0
    %178 = vmatpush1.msra.mxu0 0.0
    %179 = vmatprep.subr.mxu0 0.0
    %180 = vmatpush1.msra.mxu0 0.0
    %181 = vmatprep.subr.mxu0 0.0
    %182 = vmatpush1.msra.mxu0 0.0
    %183 = vmatprep.subr.mxu0 0.0
    %184 = vmatpush1.msra.mxu0 %v75
    %185 = vmatprep.subr.mxu0 0.0
    %186 = vmatpush1.msra.mxu0 %v74
    %187 = vmatprep.subr.mxu0 0.0
    %188 = vmatpush1.msra.mxu0 %v73
    %189 = vmatprep.subr.mxu0 0.0
    %190 = vmatpush1.msra.mxu0 %v72
    %191 = vmatprep.subr.mxu0 0.0
    %192 = vmatpush2.msra.mxu0 0.0
    %193 = vmatprep.subr.mxu0 0.0
    %194 = vmatpush2.msra.mxu0 0.0
    %195 = vmatprep.subr.mxu0 0.0
    %196 = vmatpush2.msra.mxu0 0.0
    %197 = vmatprep.subr.mxu0 0.0
    %198 = vmatpush2.msra.mxu0 0.0
    %199 = vmatprep.subr.mxu0 0.0
    %200 = vmatpush2.msra.mxu0 0.0
    %201 = vmatprep.subr.mxu0 0.0
    %202 = vmatpush2.msra.mxu0 0.0
    %203 = vmatprep.subr.mxu0 0.0
    %204 = vmatpush2.msra.mxu0 0.0
    %205 = vmatprep.subr.mxu0 0.0
    %206 = vmatpush2.msra.mxu0 0.0
    %207 = vmatprep.subr.mxu0 0.0
    %208 = vmatpush2.msra.mxu0 0.0
    %209 = vmatprep.subr.mxu0 0.0
    %210 = vmatpush2.msra.mxu0 0.0
    %211 = vmatprep.subr.mxu0 0.0
    %212 = vmatpush2.msra.mxu0 0.0
    %213 = vmatprep.subr.mxu0 0.0
    %214 = vmatpush2.msra.mxu0 0.0
    %215 = vmatprep.subr.mxu0 0.0
    %216 = vmatpush2.msra.mxu0 0.0
    %217 = vmatprep.subr.mxu0 0.0
    %218 = vmatpush2.msra.mxu0 0.0
    %219 = vmatprep.subr.mxu0 0.0
    %220 = vmatpush2.msra.mxu0 0.0
    %221 = vmatprep.subr.mxu0 0.0
    %222 = vmatpush2.msra.mxu0 0.0
    %223 = vmatprep.mubr.f32.mxu0 0.0
    %224 = vmatmul.mubr.f32.gmra.mxu0 %v157
    %v225 = vpop.f32.mrf.mxu0
    %v226 = vadd.f32 %v152, %v225
    %v227 = vpop.f32.mrf.mxu0
    %228 = vdwg.mxu0
    %v229 = vld [vmem:[#allocation2] sm:$0x1]
    %v231 = vlaneseq
    %v232 = vshrl.u32 %v231, 7
    %v233 = vsub.s32 0, %v232
    %v234 = vrot.slane %v229, %v233
    %v236 = vadd.f32 %v226, %v234
    %vm237 = vcmask 58368
    %v238 = vsel %vm237, %v236, -inf
    %239 = vmax.xlane.f32.xlu0 %v238
    %v240 = vpop.xlane.xlu0 %239
    %v241 = vsub.f32 %v236, %v240
    %v242 = vmul.f32 %v241, 1.442695
    %v243 = vpow.pop %v242
    %v244 = vsel %vm237, %v243, 0.0
    %245 = vadd.xlane.f32.xlu0 %v244
    %v246 = vpop.xlane.xlu0 %245
    %v247 = vrcp.pop %v246
    %v248 = vmul.f32 1.0, %v247
    %v249 = vmul.f32 %v243, %v248
    %v250 = vlaneseq
    %v251 = vshrl.u32 %v250, 7
    %v252 = vsub.s32 0, %v251
    %v253 = vrot.slane %v249, %v252
    %255 = vbcast.lane.b32.xlu0 %v253, 256
    %v256 = vpop.permute.xlu0 %255
    %v257 = vlaneseq
    %v258 = vshrl.u32 %v257, 7
    %v259 = vsub.s32 1, %v258
    %v260 = vrot.slane %v249, %v259
    %262 = vbcast.lane.b32.xlu0 %v260, 256
    %v263 = vpop.permute.xlu0 %262
    %v264 = vld [vmem:[%s0] sm:$0xff]
    %v265 = vld [vmem:[%s0 + $0x8] sm:$0xff]
    %v266 = vmul.f32 %v256, %v264
    %v267 = vmul.f32 %v263, %v265
    %v268 = vsel %vm155, %v266, 0.0
    %v269 = vrot.slane %v268, 4
    %v270 = vadd.f32 %v268, %v269
    %v271 = vrot.slane %v270, 2
    %v272 = vadd.f32 %v270, %v271
    %v273 = vrot.slane %v272, 1
    %v274 = vadd.f32 %v272, %v273
    %v275 = vsel %vm155, %v267, 0.0
    %v276 = vrot.slane %v275, 4
    %v277 = vadd.f32 %v275, %v276
    %v278 = vrot.slane %v277, 2
    %v279 = vadd.f32 %v277, %v278
    %v280 = vrot.slane %v279, 1
    %v281 = vadd.f32 %v279, %v280
    %vm284 = vcmask 1041409
    %v285 = vsel %vm284, %v281, %v274
    %287 = vrot.lane.b32.xlu0 %v70, 32
    %v288 = vpop.permute.xlu0 %287
    %v290 = vsel %vm155, %v285, %v288
    %v291 = vld [vmem:[%s6] sm:$0xff]
    %v292 = vld [vmem:[%s6 + $0x8] sm:$0xff]
    %v293 = vld [vmem:[%s6 + $0x10] sm:$0xff]
    %v294 = vld [vmem:[%s6 + $0x18] sm:$0xff]
    %v295 = vld [vmem:[%s6 + $0x20] sm:$0xff]
    %v296 = vld [vmem:[%s6 + $0x28] sm:$0xff]
    %v297 = vld [vmem:[%s6 + $0x30] sm:$0xff]
    %v298 = vld [vmem:[%s6 + $0x38] sm:$0xff]
    %v299 = vld [vmem:[#allocation4] sm:$0x1]
    %v301 = vlaneseq
    %v302 = vshrl.u32 %v301, 7
    %v303 = vsub.s32 0, %v302
    %v304 = vrot.slane %v299, %v303
    %vm306 = vcmask 523264
    %v308 = vsel %vm306, %v290, 0
    %310 = vmatprep.subr.mxu0 0.0
    %311 = vmatpush1.msra.mxu0 0.0
    %312 = vmatprep.subr.mxu0 0.0
    %313 = vmatpush1.msra.mxu0 0.0
    %314 = vmatprep.subr.mxu0 0.0
    %315 = vmatpush1.msra.mxu0 0.0
    %316 = vmatprep.subr.mxu0 0.0
    %317 = vmatpush1.msra.mxu0 0.0
    %318 = vmatprep.subr.mxu0 0.0
    %319 = vmatpush1.msra.mxu0 0.0
    %320 = vmatprep.subr.mxu0 0.0
    %321 = vmatpush1.msra.mxu0 0.0
    %322 = vmatprep.subr.mxu0 0.0
    %323 = vmatpush1.msra.mxu0 0.0
    %324 = vmatprep.subr.mxu0 0.0
    %325 = vmatpush1.msra.mxu0 0.0
    %326 = vmatprep.subr.mxu0 0.0
    %327 = vmatpush1.msra.mxu0 %v298
    %328 = vmatprep.subr.mxu0 0.0
    %329 = vmatpush1.msra.mxu0 %v297
    %330 = vmatprep.subr.mxu0 0.0
    %331 = vmatpush1.msra.mxu0 %v296
    %332 = vmatprep.subr.mxu0 0.0
    %333 = vmatpush1.msra.mxu0 %v295
    %334 = vmatprep.subr.mxu0 0.0
    %335 = vmatpush1.msra.mxu0 %v294
    %336 = vmatprep.subr.mxu0 0.0
    %337 = vmatpush1.msra.mxu0 %v293
    %338 = vmatprep.subr.mxu0 0.0
    %339 = vmatpush1.msra.mxu0 %v292
    %340 = vmatprep.subr.mxu0 0.0
    %341 = vmatpush1.msra.mxu0 %v291
    %342 = vmatprep.subr.mxu0 0.0
    %343 = vmatpush2.msra.mxu0 0.0
    %344 = vmatprep.subr.mxu0 0.0
    %345 = vmatpush2.msra.mxu0 0.0
    %346 = vmatprep.subr.mxu0 0.0
    %347 = vmatpush2.msra.mxu0 0.0
    %348 = vmatprep.subr.mxu0 0.0
    %349 = vmatpush2.msra.mxu0 0.0
    %350 = vmatprep.subr.mxu0 0.0
    %351 = vmatpush2.msra.mxu0 0.0
    %352 = vmatprep.subr.mxu0 0.0
    %353 = vmatpush2.msra.mxu0 0.0
    %354 = vmatprep.subr.mxu0 0.0
    %355 = vmatpush2.msra.mxu0 0.0
    %356 = vmatprep.subr.mxu0 0.0
    %357 = vmatpush2.msra.mxu0 0.0
    %358 = vmatprep.subr.mxu0 0.0
    %359 = vmatpush2.msra.mxu0 0.0
    %360 = vmatprep.subr.mxu0 0.0
    %361 = vmatpush2.msra.mxu0 0.0
    %362 = vmatprep.subr.mxu0 0.0
    %363 = vmatpush2.msra.mxu0 0.0
    %364 = vmatprep.subr.mxu0 0.0
    %365 = vmatpush2.msra.mxu0 0.0
    %366 = vmatprep.subr.mxu0 0.0
    %367 = vmatpush2.msra.mxu0 0.0
    %368 = vmatprep.subr.mxu0 0.0
    %369 = vmatpush2.msra.mxu0 0.0
    %370 = vmatprep.subr.mxu0 0.0
    %371 = vmatpush2.msra.mxu0 0.0
    %372 = vmatprep.subr.mxu0 0.0
    %373 = vmatpush2.msra.mxu0 0.0
    %374 = vmatprep.mubr.f32.mxu0 0.0
    %375 = vmatmul.mubr.f32.gmra.mxu0 %v308
    %v376 = vpop.f32.mrf.mxu0
    %v377 = vadd.f32 %v304, %v376
    %v378 = vpop.f32.mrf.mxu0
    %379 = vdwg.mxu0
    %v380 = vxor.u32 %v377, 2147483648
    %v381 = vmul.f32 %v380, 1.442695
    %v382 = vpow.pop %v381
    %v383 = vadd.f32 %v382, 1.0
    %v384 = vrcp.pop %v383
    %v385 = vmul.f32 1.0, %v384
    %v386 = vtanh.pop %v377
    %v387 = vmul.f32 %v385, %v288
    %389 = vrot.lane.b32.xlu0 %v386, 64
    %v390 = vpop.permute.xlu0 %389
    %v392 = vmul.f32 %v385, %v390
    %394 = vrot.lane.b32.xlu0 %v392, 32
    %v395 = vpop.permute.xlu0 %394
    %v397 = vadd.f32 %v387, %v395
    %v398 = vld [vmem:[%s8] sm:$0xff]
    %v399 = vld [vmem:[%s8 + $0x8] sm:$0xff]
    %v400 = vld [vmem:[%s8 + $0x10] sm:$0xff]
    %v401 = vld [vmem:[%s8 + $0x18] sm:$0xff]
    %v402 = vld [vmem:[#allocation6] sm:$0x1]
    %v404 = vlaneseq
    %v405 = vshrl.u32 %v404, 7
    %v406 = vsub.s32 0, %v405
    %v407 = vrot.slane %v402, %v406
    %410 = vrot.lane.b32.xlu0 %v397, 96
    %v411 = vpop.permute.xlu0 %410
    %v412 = vsel %vm155, %v411, 0
    %414 = vmatprep.subr.mxu0 0.0
    %415 = vmatpush1.msra.mxu0 0.0
    %416 = vmatprep.subr.mxu0 0.0
    %417 = vmatpush1.msra.mxu0 0.0
    %418 = vmatprep.subr.mxu0 0.0
    %419 = vmatpush1.msra.mxu0 0.0
    %420 = vmatprep.subr.mxu0 0.0
    %421 = vmatpush1.msra.mxu0 0.0
    %422 = vmatprep.subr.mxu0 0.0
    %423 = vmatpush1.msra.mxu0 0.0
    %424 = vmatprep.subr.mxu0 0.0
    %425 = vmatpush1.msra.mxu0 0.0
    %426 = vmatprep.subr.mxu0 0.0
    %427 = vmatpush1.msra.mxu0 0.0
    %428 = vmatprep.subr.mxu0 0.0
    %429 = vmatpush1.msra.mxu0 0.0
    %430 = vmatprep.subr.mxu0 0.0
    %431 = vmatpush1.msra.mxu0 0.0
    %432 = vmatprep.subr.mxu0 0.0
    %433 = vmatpush1.msra.mxu0 0.0
    %434 = vmatprep.subr.mxu0 0.0
    %435 = vmatpush1.msra.mxu0 0.0
    %436 = vmatprep.subr.mxu0 0.0
    %437 = vmatpush1.msra.mxu0 0.0
    %438 = vmatprep.subr.mxu0 0.0
    %439 = vmatpush1.msra.mxu0 %v401
    %440 = vmatprep.subr.mxu0 0.0
    %441 = vmatpush1.msra.mxu0 %v400
    %442 = vmatprep.subr.mxu0 0.0
    %443 = vmatpush1.msra.mxu0 %v399
    %444 = vmatprep.subr.mxu0 0.0
    %445 = vmatpush1.msra.mxu0 %v398
    %446 = vmatprep.subr.mxu0 0.0
    %447 = vmatpush2.msra.mxu0 0.0
    %448 = vmatprep.subr.mxu0 0.0
    %449 = vmatpush2.msra.mxu0 0.0
    %450 = vmatprep.subr.mxu0 0.0
    %451 = vmatpush2.msra.mxu0 0.0
    %452 = vmatprep.subr.mxu0 0.0
    %453 = vmatpush2.msra.mxu0 0.0
    %454 = vmatprep.subr.mxu0 0.0
    %455 = vmatpush2.msra.mxu0 0.0
    %456 = vmatprep.subr.mxu0 0.0
    %457 = vmatpush2.msra.mxu0 0.0
    %458 = vmatprep.subr.mxu0 0.0
    %459 = vmatpush2.msra.mxu0 0.0
    %460 = vmatprep.subr.mxu0 0.0
    %461 = vmatpush2.msra.mxu0 0.0
    %462 = vmatprep.subr.mxu0 0.0
    %463 = vmatpush2.msra.mxu0 0.0
    %464 = vmatprep.subr.mxu0 0.0
    %465 = vmatpush2.msra.mxu0 0.0
    %466 = vmatprep.subr.mxu0 0.0
    %467 = vmatpush2.msra.mxu0 0.0
    %468 = vmatprep.subr.mxu0 0.0
    %469 = vmatpush2.msra.mxu0 0.0
    %470 = vmatprep.subr.mxu0 0.0
    %471 = vmatpush2.msra.mxu0 0.0
    %472 = vmatprep.subr.mxu0 0.0
    %473 = vmatpush2.msra.mxu0 0.0
    %474 = vmatprep.subr.mxu0 0.0
    %475 = vmatpush2.msra.mxu0 0.0
    %476 = vmatprep.subr.mxu0 0.0
    %477 = vmatpush2.msra.mxu0 0.0
    %478 = vmatprep.mubr.f32.mxu0 0.0
    %479 = vmatmul.mubr.f32.gmra.mxu0 %v412
    %v480 = vpop.f32.mrf.mxu0
    %v481 = vadd.f32 %v407, %v480
    %v482 = vpop.f32.mrf.mxu0
    %483 = vdwg.mxu0
    %486 = vrot.lane.b32.xlu0 %v481, 32
    %v487 = vpop.permute.xlu0 %486
    %v489 = vsel %vm155, %v411, %v487
    %vm490 = vcmask 287744
    %491 = vst.msk [vmem:[%s10] sm:$0x3] %vm490, %v489
    // Predicated region
    $region54: #{attention_decoder_cell.1} parent=1 // pred_check
      _
    $region55: #{attention_decoder_cell.1} parent=1 // pred_check_branch
      %493 = sbr.rel (0) target = $region57
    $region56: #{attention_decoder_cell.1} parent=1 // pred_region
      _
    $region57: #{attention_decoder_cell.1} parent=1 // pred_fallthru
      _
    // Predicated region
    $region58: #{attention_decoder_cell.1} parent=1 // pred_check
      _
    $region59: #{attention_decoder_cell.1} parent=1 // pred_check_branch
      %495 = sbr.rel (0) target = $region61
    $region60: #{attention_decoder_cell.1} parent=1 // pred_region
      _
    $region61: #{attention_decoder_cell.1} parent=1 // pred_fallthru
      _
    %496 = vsyncpa [#allocation3], 1
    %497 = vsyncpa [#allocation5], 1

</llo_original>
